<compile_context>
chip_gen: v7x
topology: tpu7x:2x2x1
jax: 0.10.0
libtpu: 0.0.40
codegen_flags: <defaults>
</compile_context>

<pallas_src>
import functools

import jax
import jax.numpy as jnp
from jax.experimental import pallas as pl
from jax.experimental.pallas import tpu as pltpu


def _round_up(x, m):
    return ((x + m - 1) // m) * m


def _mlp_kernel(n_layers, x_ref, *refs):
    """refs = (w0, b0, w1, b1, ..., w_{L-1}, b_{L-1}, out_ref).

    Weights are pre-transposed to (C_in, C_out); the last weight/bias already
    have eval-mode BatchNorm folded in.
    """
    out_ref = refs[-1]

    h = x_ref[...]                      # stored dtype (f32); cast per-layer below
    for l in range(n_layers):
        w_ref = refs[2 * l]
        b_ref = refs[2 * l + 1]
        # MXU matmul with f32 accumulation; operands fed in the weight dtype
        # (the cast happens in-kernel so no extra HBM pass is needed).
        h = jnp.dot(h.astype(w_ref.dtype), w_ref[...],
                    preferred_element_type=jnp.float32)
        h = h + b_ref[...]              # bias kept in f32
        if l < n_layers - 1:
            # ReLU6 (Dropout is identity in eval mode), in f32 on the VPU.
            h = jnp.clip(h, 0.0, 6.0)
    out_ref[...] = h.astype(out_ref.dtype)


def mlp_forward(x, weights, biases, bn_scale, bn_shift, *,
                compute_dtype=jnp.float32, out_dtype=None, block_b=2048):
    """Fused MLP forward.

    x:          (B, widths[0])
    weights[i]: (widths[i], widths[i+1])   (already transposed for h @ W)
    biases[i]:  (1, widths[i+1])
    bn_scale / bn_shift: (1, widths[-1])   folded eval-mode BatchNorm params
    """
    B, c_in = x.shape
    n_layers = len(weights)
    out_dim = weights[-1].shape[1]
    out_dtype = x.dtype if out_dtype is None else out_dtype

    # ---- Fold BatchNorm into the last Linear (pure pre-compute, XLA side) ---
    w_last = weights[-1] * bn_scale                 # (C, out_dim)
    b_last = biases[-1] * bn_scale + bn_shift       # (1, out_dim)

    # ---- Lane-dense output only when it is cheap ----------------------------
    # Tiny out_dim (e.g. 16): emit unpadded columns and accept masked partial
    # stores instead of 8x output-byte inflation + an extra slice pass.
    if out_dim % 128 != 0 and out_dim >= 64:
        out_cols = _round_up(out_dim, 128)
        w_last = jnp.pad(w_last, ((0, 0), (0, out_cols - out_dim)))
        b_last = jnp.pad(b_last, ((0, 0), (0, out_cols - out_dim)))
    else:
        out_cols = out_dim

    ws = [w.astype(compute_dtype) for w in weights[:-1]] + [w_last.astype(compute_dtype)]
    bs = [b.astype(jnp.float32) for b in biases[:-1]] + [b_last.astype(jnp.float32)]

    # ---- Batch tiling with an explicit VMEM budget ---------------------------
    param_bytes = sum(int(a.size) * jnp.dtype(a.dtype).itemsize for a in ws + bs)
    x_item = jnp.dtype(x.dtype).itemsize
    o_item = jnp.dtype(out_dtype).itemsize

    def footprint(t):
        # x / out tiles are double-buffered by the pipeline; params have a
        # constant index_map (resident) but are counted 2x to stay conservative.
        return 2 * t * (c_in * x_item + out_cols * o_item) + 2 * param_bytes

    VMEM_BUDGET = 40 << 20                          # safe under v7x's 64 MiB/TC
    tb = _round_up(min(block_b, _round_up(B, 8)), 8)  # multiple of 8 sublanes
    while tb > 8 and footprint(tb) > VMEM_BUDGET:
        tb = _round_up(max(tb // 2, 8), 8)

    # Ragged last block handled by Pallas (reads padded, writes masked):
    # no XLA-side jnp.pad over x, no row slice on the output.
    grid = (pl.cdiv(B, tb),)

    in_specs = [pl.BlockSpec((tb, c_in), lambda i: (i, 0))]
    for w, b in zip(ws, bs):
        # Constant index_map -> weights/biases stay VMEM-resident across steps.
        in_specs.append(pl.BlockSpec(w.shape, lambda i: (0, 0)))
        in_specs.append(pl.BlockSpec(b.shape, lambda i: (0, 0)))
    out_specs = pl.BlockSpec((tb, out_cols), lambda i: (i, 0))

    cp_kwargs = dict(dimension_semantics=("parallel",))
    if footprint(tb) > (32 << 20):
        # Exceeds the scoped default on v6e/v7x -> request it explicitly.
        cp_kwargs["vmem_limit_bytes"] = min(footprint(tb) + (4 << 20), 64 << 20)

    kernel = functools.partial(_mlp_kernel, n_layers)
    flat_params = [a for pair in zip(ws, bs) for a in pair]

    out = pl.pallas_call(
        kernel,
        out_shape=jax.ShapeDtypeStruct((B, out_cols), out_dtype),
        grid=grid,
        in_specs=in_specs,
        out_specs=out_specs,
        compiler_params=pltpu.CompilerParams(**cp_kwargs),
    )(x, *flat_params)

    if out_cols != out_dim:
        out = out[:, :out_dim]
    return out


def _reference(x, weights, biases, bn_scale, bn_shift):
    h = x
    n_layers = len(weights)
    for i, (w, b) in enumerate(zip(weights, biases)):
        h = h @ w + b
        if i < n_layers - 1:
            h = jnp.clip(h, 0.0, 6.0)
    return h * bn_scale + bn_shift


if __name__ == "__main__":
    key = jax.random.PRNGKey(0)
    widths = [32, 64, 48, 16]   # [in_channel, hidden..., out_channel]
    B = 8
    n_layers = len(widths) - 1

    keys = jax.random.split(key, 1 + 2 * n_layers)
    x = jax.random.normal(keys[0], (B, widths[0]), jnp.float32)

    weights, biases = [], []
    for i in range(n_layers):
        w = jax.random.normal(keys[1 + 2 * i], (widths[i], widths[i + 1]), jnp.float32) * 0.1
        b = jax.random.normal(keys[2 + 2 * i], (1, widths[i + 1]), jnp.float32) * 0.1
        weights.append(w)
        biases.append(b)

    # BatchNorm1d parameters at deterministic init (gamma=1, beta=0,
    # running_mean=0, running_var=1), folded to scale/shift.
    eps = 1e-5
    gamma = jnp.ones((1, widths[-1]), jnp.float32)
    beta = jnp.zeros((1, widths[-1]), jnp.float32)
    running_mean = jnp.zeros((1, widths[-1]), jnp.float32)
    running_var = jnp.ones((1, widths[-1]), jnp.float32)
    bn_scale = gamma / jnp.sqrt(running_var + eps)
    bn_shift = beta - running_mean * bn_scale

    ref = _reference(x, weights, biases, bn_scale, bn_shift)

    # f32 path (tight correctness check).
    out_f32 = mlp_forward(x, weights, biases, bn_scale, bn_shift,
                          compute_dtype=jnp.float32)
    out_f32 = jax.block_until_ready(out_f32)
    assert out_f32.shape == (B, widths[-1])
    assert jnp.allclose(out_f32, ref, atol=1e-4, rtol=1e-4), "f32 mismatch vs reference"

    # bf16-weight path: x stays f32 in HBM, cast to bf16 happens inside the
    # kernel per tile; accumulation / bias / clip remain f32.
    out_bf16 = mlp_forward(x, weights, biases, bn_scale, bn_shift,
                           compute_dtype=jnp.bfloat16)
    out_bf16 = jax.block_until_ready(out_bf16)
    assert out_bf16.shape == (B, widths[-1])
    assert jnp.allclose(out_bf16, ref, atol=1e-1, rtol=1e-1), "bf16 mismatch vs reference"

    print("KERNEL_OK")
</pallas_src>

<mosaic_0001>
module attributes {stable_mosaic.version = 11 : i64} {
  func.func @_mlp_kernel(%arg0: i32, %arg1: memref<8x32xf32, #tpu.memory_space<vmem>>, %arg2: memref<32x64xf32, #tpu.memory_space<vmem>>, %arg3: memref<1x64xf32, #tpu.memory_space<vmem>>, %arg4: memref<64x48xf32, #tpu.memory_space<vmem>>, %arg5: memref<1x48xf32, #tpu.memory_space<vmem>>, %arg6: memref<48x16xf32, #tpu.memory_space<vmem>>, %arg7: memref<1x16xf32, #tpu.memory_space<vmem>>, %arg8: memref<8x16xf32, #tpu.memory_space<vmem>>) attributes {dimension_semantics = [#tpu.dimension_semantics<parallel>], iteration_bounds = array<i64: 1>, scalar_prefetch = 0 : i64, scratch_operands = 0 : i64, tpu.core_type = #tpu.core_type<tc>, window_params = [{transform_indices = @transform_0, window_bounds = array<i64: 8, 32>}, {pipeline_mode = #tpu.pipeline_mode<synchronous>, transform_indices = @transform_1, window_bounds = array<i64: 32, 64>}, {pipeline_mode = #tpu.pipeline_mode<synchronous>, transform_indices = @transform_2, window_bounds = array<i64: 1, 64>}, {pipeline_mode = #tpu.pipeline_mode<synchronous>, transform_indices = @transform_3, window_bounds = array<i64: 64, 48>}, {pipeline_mode = #tpu.pipeline_mode<synchronous>, transform_indices = @transform_4, window_bounds = array<i64: 1, 48>}, {pipeline_mode = #tpu.pipeline_mode<synchronous>, transform_indices = @transform_5, window_bounds = array<i64: 48, 16>}, {pipeline_mode = #tpu.pipeline_mode<synchronous>, transform_indices = @transform_6, window_bounds = array<i64: 1, 16>}, {transform_indices = @transform_7, window_bounds = array<i64: 8, 16>}]} {
    %c0 = arith.constant 0 : index
    %c0_0 = arith.constant 0 : index
    %0 = vector.load %arg1[%c0, %c0_0] : memref<8x32xf32, #tpu.memory_space<vmem>>, vector<8x32xf32>
    %c0_1 = arith.constant 0 : index
    %c0_2 = arith.constant 0 : index
    %1 = vector.load %arg2[%c0_1, %c0_2] : memref<32x64xf32, #tpu.memory_space<vmem>>, vector<32x64xf32>
    %cst = arith.constant dense<0.000000e+00> : vector<8x64xf32>
    %2 = tpu.matmul %0, %1, %cst {dimension_numbers = #tpu.dot_dimension_numbers<[1], [0], [0], [1], [0, 0, 1, 1], [], []>} : vector<8x32xf32>, vector<32x64xf32>, vector<8x64xf32> -> vector<8x64xf32>
    %c0_3 = arith.constant 0 : index
    %c0_4 = arith.constant 0 : index
    %3 = vector.load %arg3[%c0_3, %c0_4] : memref<1x64xf32, #tpu.memory_space<vmem>>, vector<1x64xf32>
    %4 = vector.broadcast %3 : vector<1x64xf32> to vector<8x64xf32>
    %5 = arith.addf %2, %4 : vector<8x64xf32>
    %cst_5 = arith.constant 0.000000e+00 : f32
    %cst_6 = arith.constant 6.000000e+00 : f32
    %6 = vector.broadcast %cst_5 : f32 to vector<8x64xf32>
    %7 = arith.maximumf %6, %5 : vector<8x64xf32>
    %8 = vector.broadcast %cst_6 : f32 to vector<8x64xf32>
    %9 = arith.minimumf %8, %7 : vector<8x64xf32>
    %c0_7 = arith.constant 0 : index
    %c0_8 = arith.constant 0 : index
    %10 = vector.load %arg4[%c0_7, %c0_8] : memref<64x48xf32, #tpu.memory_space<vmem>>, vector<64x48xf32>
    %cst_9 = arith.constant dense<0.000000e+00> : vector<8x48xf32>
    %11 = tpu.matmul %9, %10, %cst_9 {dimension_numbers = #tpu.dot_dimension_numbers<[1], [0], [0], [1], [0, 0, 1, 1], [], []>} : vector<8x64xf32>, vector<64x48xf32>, vector<8x48xf32> -> vector<8x48xf32>
    %c0_10 = arith.constant 0 : index
    %c0_11 = arith.constant 0 : index
    %12 = vector.load %arg5[%c0_10, %c0_11] : memref<1x48xf32, #tpu.memory_space<vmem>>, vector<1x48xf32>
    %13 = vector.broadcast %12 : vector<1x48xf32> to vector<8x48xf32>
    %14 = arith.addf %11, %13 : vector<8x48xf32>
    %cst_12 = arith.constant 0.000000e+00 : f32
    %cst_13 = arith.constant 6.000000e+00 : f32
    %15 = vector.broadcast %cst_12 : f32 to vector<8x48xf32>
    %16 = arith.maximumf %15, %14 : vector<8x48xf32>
    %17 = vector.broadcast %cst_13 : f32 to vector<8x48xf32>
    %18 = arith.minimumf %17, %16 : vector<8x48xf32>
    %c0_14 = arith.constant 0 : index
    %c0_15 = arith.constant 0 : index
    %19 = vector.load %arg6[%c0_14, %c0_15] : memref<48x16xf32, #tpu.memory_space<vmem>>, vector<48x16xf32>
    %cst_16 = arith.constant dense<0.000000e+00> : vector<8x16xf32>
    %20 = tpu.matmul %18, %19, %cst_16 {dimension_numbers = #tpu.dot_dimension_numbers<[1], [0], [0], [1], [0, 0, 1, 1], [], []>} : vector<8x48xf32>, vector<48x16xf32>, vector<8x16xf32> -> vector<8x16xf32>
    %c0_17 = arith.constant 0 : index
    %c0_18 = arith.constant 0 : index
    %21 = vector.load %arg7[%c0_17, %c0_18] : memref<1x16xf32, #tpu.memory_space<vmem>>, vector<1x16xf32>
    %22 = vector.broadcast %21 : vector<1x16xf32> to vector<8x16xf32>
    %23 = arith.addf %20, %22 : vector<8x16xf32>
    %c0_19 = arith.constant 0 : index
    %c0_20 = arith.constant 0 : index
    %24 = vector.load %arg8[%c0_19, %c0_20] : memref<8x16xf32, #tpu.memory_space<vmem>>, vector<8x16xf32>
    tpu.vector_store %arg8[%c0_19, %c0_20], %23 {strides = array<i32>} : memref<8x16xf32, #tpu.memory_space<vmem>>, vector<8x16xf32>,
    return
  }
  func.func @transform_0(%arg0: i32) -> (i32, i32) {
    %c0_i32 = arith.constant 0 : i32
    %c0_i32_0 = arith.constant 0 : i32
    return %arg0, %c0_i32 : i32, i32
  }
  func.func @transform_1(%arg0: i32) -> (i32, i32) {
    %c0_i32 = arith.constant 0 : i32
    %c0_i32_0 = arith.constant 0 : i32
    %c0_i32_1 = arith.constant 0 : i32
    return %c0_i32, %c0_i32_0 : i32, i32
  }
  func.func @transform_2(%arg0: i32) -> (i32, i32) {
    %c0_i32 = arith.constant 0 : i32
    %c0_i32_0 = arith.constant 0 : i32
    %c0_i32_1 = arith.constant 0 : i32
    return %c0_i32, %c0_i32_0 : i32, i32
  }
  func.func @transform_3(%arg0: i32) -> (i32, i32) {
    %c0_i32 = arith.constant 0 : i32
    %c0_i32_0 = arith.constant 0 : i32
    %c0_i32_1 = arith.constant 0 : i32
    return %c0_i32, %c0_i32_0 : i32, i32
  }
  func.func @transform_4(%arg0: i32) -> (i32, i32) {
    %c0_i32 = arith.constant 0 : i32
    %c0_i32_0 = arith.constant 0 : i32
    %c0_i32_1 = arith.constant 0 : i32
    return %c0_i32, %c0_i32_0 : i32, i32
  }
  func.func @transform_5(%arg0: i32) -> (i32, i32) {
    %c0_i32 = arith.constant 0 : i32
    %c0_i32_0 = arith.constant 0 : i32
    %c0_i32_1 = arith.constant 0 : i32
    return %c0_i32, %c0_i32_0 : i32, i32
  }
  func.func @transform_6(%arg0: i32) -> (i32, i32) {
    %c0_i32 = arith.constant 0 : i32
    %c0_i32_0 = arith.constant 0 : i32
    %c0_i32_1 = arith.constant 0 : i32
    return %c0_i32, %c0_i32_0 : i32, i32
  }
  func.func @transform_7(%arg0: i32) -> (i32, i32) {
    %c0_i32 = arith.constant 0 : i32
    %c0_i32_0 = arith.constant 0 : i32
    return %arg0, %c0_i32 : i32, i32
  }
}

</mosaic_0001>

<llo_original>
// kernel: tpu_custom_call.1
$region0: #{tpu_custom_call.1}
  #allocation0 [shape = 'u32[]', space=smem, size = 0x4, offset = 0x4, fixed_abs, tag = 'smem constant byte address 0x4 - core index']
  #allocation1 [shape = 'u32[144,128]{1,0:T(1,128)}', space=vmem, size = 0x12000, scoped, tag = 'internal scratch']
  %s0 = inlined_call_operand.vmem [shape: f32[8,32], index: 0, kind: input, shape index: {}]
  %s1 = inlined_call_operand.vmem [shape: f32[32,64], index: 1, kind: input, shape index: {}]
  %s2 = inlined_call_operand.vmem [shape: f32[1,64], index: 2, kind: input, shape index: {}]
  %s3 = inlined_call_operand.vmem [shape: f32[64,48], index: 3, kind: input, shape index: {}]
  %s4 = inlined_call_operand.vmem [shape: f32[1,48], index: 4, kind: input, shape index: {}]
  %s5 = inlined_call_operand.vmem [shape: f32[48,16], index: 5, kind: input, shape index: {}]
  %s6 = inlined_call_operand.vmem [shape: f32[1,16], index: 6, kind: input, shape index: {}]
  %s7 = inlined_call_operand.hbm [shape: f32[8,16], index: 7, kind: output, shape index: {}]
  %s8 = sld [smem:[#allocation0]]
  $region38: #{tpu_custom_call.1} parent=0
    _
  %s10 = ssub.s32 1, %s8
  %s11 = scalar_select 0, %s10, %s8
  $region1: #{tpu_custom_call.1} parent=0
    #allocation2 [shape = 'u8[4096]{0}', space=vmem, size = 0x1000, scoped, tag = 'output window, operand 0, single buffered']
    #allocation3 [shape = 's32[1]{0}', space=sflag, size = 0x4, scoped, tag = 'scoped memory for tpu_custom_call.1']
    %12 = vsyncpa [#allocation3], 0
    // Predicated region
    $region2: #{tpu_custom_call.1} parent=1 // pred_check
      _
    $region3: #{tpu_custom_call.1} parent=1 // pred_check_branch
      %14 = sbr.rel (0) target = $region5
    $region4: #{tpu_custom_call.1} parent=1 // pred_region
      _
    $region5: #{tpu_custom_call.1} parent=1 // pred_fallthru
      _
    // Predicated region
    $region6: #{tpu_custom_call.1} parent=1 // pred_check
      _
    $region7: #{tpu_custom_call.1} parent=1 // pred_check_branch
      %16 = sbr.rel (0) target = $region9
    $region8: #{tpu_custom_call.1} parent=1 // pred_region
      _
    $region9: #{tpu_custom_call.1} parent=1 // pred_fallthru
      _
    // Predicated region
    $region10: #{tpu_custom_call.1} parent=1 // pred_check
      _
    $region11: #{tpu_custom_call.1} parent=1 // pred_check_branch
      %18 = sbr.rel (0) target = $region13
    $region12: #{tpu_custom_call.1} parent=1 // pred_region
      _
    $region13: #{tpu_custom_call.1} parent=1 // pred_fallthru
      _
    // Predicated region
    $region14: #{tpu_custom_call.1} parent=1 // pred_check
      _
    $region15: #{tpu_custom_call.1} parent=1 // pred_check_branch
      %20 = sbr.rel (0) target = $region17
    $region16: #{tpu_custom_call.1} parent=1 // pred_region
      _
    $region17: #{tpu_custom_call.1} parent=1 // pred_fallthru
      _
    // Predicated region
    $region18: #{tpu_custom_call.1} parent=1 // pred_check
      _
    $region19: #{tpu_custom_call.1} parent=1 // pred_check_branch
      %22 = sbr.rel (0) target = $region21
    $region20: #{tpu_custom_call.1} parent=1 // pred_region
      _
    $region21: #{tpu_custom_call.1} parent=1 // pred_fallthru
      _
    // Predicated region
    $region22: #{tpu_custom_call.1} parent=1 // pred_check
      _
    $region23: #{tpu_custom_call.1} parent=1 // pred_check_branch
      %24 = sbr.rel (0) target = $region25
    $region24: #{tpu_custom_call.1} parent=1 // pred_region
      _
    $region25: #{tpu_custom_call.1} parent=1 // pred_fallthru
      _
    // Predicated region
    $region26: #{tpu_custom_call.1} parent=1 // pred_check
      _
    $region27: #{tpu_custom_call.1} parent=1 // pred_check_branch
      %26 = sbr.rel (0) target = $region29
    $region28: #{tpu_custom_call.1} parent=1 // pred_region
      _
    $region29: #{tpu_custom_call.1} parent=1 // pred_fallthru
      _
    %v27 = vld [vmem:[%s0] sm:$0xff]
    %v28 = vld [vmem:[%s1] sm:$0xff]
    %v29 = vld [vmem:[%s1 + $0x8] sm:$0xff]
    %v30 = vld [vmem:[%s1 + $0x10] sm:$0xff]
    %v31 = vld [vmem:[%s1 + $0x18] sm:$0xff]
    %v32 = vld [vmem:[%s2] sm:$0x1]
    %v34 = vlaneseq
    %v35 = vshrl.u32 %v34, 7
    %v36 = vsub.s32 0, %v35
    %v37 = vrot.slane %v32, %v36
    %vm39 = vcmask 261120
    %v41 = vsel %vm39, %v27, 0
    %43 = vmatprep.subr.mxu0 0.0
    %44 = vmatpush1.msra.mxu0 %v28
    %45 = vmatprep.subr.mxu0 0.0
    %46 = vmatpush1.msra.mxu0 %v29
    %47 = vmatprep.subr.mxu0 0.0
    %48 = vmatpush1.msra.mxu0 %v30
    %49 = vmatprep.subr.mxu0 0.0
    %50 = vmatpush1.msra.mxu0 %v31
    %51 = vmatprep.subr.mxu0 0.0
    %52 = vmatpush1.msra.mxu0 0.0
    %53 = vmatprep.subr.mxu0 0.0
    %54 = vmatpush1.msra.mxu0 0.0
    %55 = vmatprep.subr.mxu0 0.0
    %56 = vmatpush1.msra.mxu0 0.0
    %57 = vmatprep.subr.mxu0 0.0
    %58 = vmatpush1.msra.mxu0 0.0
    %59 = vmatprep.subr.mxu0 0.0
    %60 = vmatpush1.msra.mxu0 0.0
    %61 = vmatprep.subr.mxu0 0.0
    %62 = vmatpush1.msra.mxu0 0.0
    %63 = vmatprep.subr.mxu0 0.0
    %64 = vmatpush1.msra.mxu0 0.0
    %65 = vmatprep.subr.mxu0 0.0
    %66 = vmatpush1.msra.mxu0 0.0
    %67 = vmatprep.subr.mxu0 0.0
    %68 = vmatpush1.msra.mxu0 0.0
    %69 = vmatprep.subr.mxu0 0.0
    %70 = vmatpush1.msra.mxu0 0.0
    %71 = vmatprep.subr.mxu0 0.0
    %72 = vmatpush1.msra.mxu0 0.0
    %73 = vmatprep.subr.mxu0 0.0
    %74 = vmatpush1.msra.mxu0 0.0
    %75 = vmatprep.subr.mxu0 0.0
    %76 = vmatpush1.msra.mxu0 0.0
    %77 = vmatprep.subr.mxu0 0.0
    %78 = vmatpush1.msra.mxu0 0.0
    %79 = vmatprep.subr.mxu0 0.0
    %80 = vmatpush1.msra.mxu0 0.0
    %81 = vmatprep.subr.mxu0 0.0
    %82 = vmatpush1.msra.mxu0 0.0
    %83 = vmatprep.subr.mxu0 0.0
    %84 = vmatpush1.msra.mxu0 0.0
    %85 = vmatprep.subr.mxu0 0.0
    %86 = vmatpush1.msra.mxu0 0.0
    %87 = vmatprep.subr.mxu0 0.0
    %88 = vmatpush1.msra.mxu0 0.0
    %89 = vmatprep.subr.mxu0 0.0
    %90 = vmatpush1.msra.mxu0 0.0
    %91 = vmatprep.subr.mxu0 0.0
    %92 = vmatpush1.msra.mxu0 0.0
    %93 = vmatprep.subr.mxu0 0.0
    %94 = vmatpush1.msra.mxu0 0.0
    %95 = vmatprep.subr.mxu0 0.0
    %96 = vmatpush1.msra.mxu0 0.0
    %97 = vmatprep.subr.mxu0 0.0
    %98 = vmatpush1.msra.mxu0 0.0
    %99 = vmatprep.subr.mxu0 0.0
    %100 = vmatpush1.msra.mxu0 0.0
    %101 = vmatprep.subr.mxu0 0.0
    %102 = vmatpush1.msra.mxu0 0.0
    %103 = vmatprep.subr.mxu0 0.0
    %104 = vmatpush1.msra.mxu0 0.0
    %105 = vmatprep.subr.mxu0 0.0
    %106 = vmatpush1.msra.mxu0 0.0
    %107 = vmatprep.mubr.f32.mxu0 0.0
    %108 = vmatmul.mubr.f32.gmra.mrb[0].mxu0 %v41
    %v109 = vpop.f32.mrb[0].mxu0
    %v110 = vadd.f32 %v37, %v109
    %v111 = vpop.f32.mrb[0].mxu0
    %112 = vdwg.mxu0
    %v113 = vmax.f32 %v110, 0.0
    %v114 = vmin.f32 %v113, 6.0
    %v115 = vld [vmem:[%s3] sm:$0xff]
    %v116 = vld [vmem:[%s3 + $0x8] sm:$0xff]
    %v117 = vld [vmem:[%s3 + $0x10] sm:$0xff]
    %v118 = vld [vmem:[%s3 + $0x18] sm:$0xff]
    %v119 = vld [vmem:[%s3 + $0x20] sm:$0xff]
    %v120 = vld [vmem:[%s3 + $0x28] sm:$0xff]
    %v121 = vld [vmem:[%s3 + $0x30] sm:$0xff]
    %v122 = vld [vmem:[%s3 + $0x38] sm:$0xff]
    %v123 = vld [vmem:[%s4] sm:$0x1]
    %v125 = vlaneseq
    %v126 = vshrl.u32 %v125, 7
    %v127 = vsub.s32 0, %v126
    %v128 = vrot.slane %v123, %v127
    %vm130 = vcmask 523264
    %v132 = vsel %vm130, %v114, 0
    %134 = vmatprep.subr.mxu0 0.0
    %135 = vmatpush1.msra.mxu0 %v115
    %136 = vmatprep.subr.mxu0 0.0
    %137 = vmatpush1.msra.mxu0 %v116
    %138 = vmatprep.subr.mxu0 0.0
    %139 = vmatpush1.msra.mxu0 %v117
    %140 = vmatprep.subr.mxu0 0.0
    %141 = vmatpush1.msra.mxu0 %v118
    %142 = vmatprep.subr.mxu0 0.0
    %143 = vmatpush1.msra.mxu0 %v119
    %144 = vmatprep.subr.mxu0 0.0
    %145 = vmatpush1.msra.mxu0 %v120
    %146 = vmatprep.subr.mxu0 0.0
    %147 = vmatpush1.msra.mxu0 %v121
    %148 = vmatprep.subr.mxu0 0.0
    %149 = vmatpush1.msra.mxu0 %v122
    %150 = vmatprep.subr.mxu0 0.0
    %151 = vmatpush1.msra.mxu0 0.0
    %152 = vmatprep.subr.mxu0 0.0
    %153 = vmatpush1.msra.mxu0 0.0
    %154 = vmatprep.subr.mxu0 0.0
    %155 = vmatpush1.msra.mxu0 0.0
    %156 = vmatprep.subr.mxu0 0.0
    %157 = vmatpush1.msra.mxu0 0.0
    %158 = vmatprep.subr.mxu0 0.0
    %159 = vmatpush1.msra.mxu0 0.0
    %160 = vmatprep.subr.mxu0 0.0
    %161 = vmatpush1.msra.mxu0 0.0
    %162 = vmatprep.subr.mxu0 0.0
    %163 = vmatpush1.msra.mxu0 0.0
    %164 = vmatprep.subr.mxu0 0.0
    %165 = vmatpush1.msra.mxu0 0.0
    %166 = vmatprep.subr.mxu0 0.0
    %167 = vmatpush1.msra.mxu0 0.0
    %168 = vmatprep.subr.mxu0 0.0
    %169 = vmatpush1.msra.mxu0 0.0
    %170 = vmatprep.subr.mxu0 0.0
    %171 = vmatpush1.msra.mxu0 0.0
    %172 = vmatprep.subr.mxu0 0.0
    %173 = vmatpush1.msra.mxu0 0.0
    %174 = vmatprep.subr.mxu0 0.0
    %175 = vmatpush1.msra.mxu0 0.0
    %176 = vmatprep.subr.mxu0 0.0
    %177 = vmatpush1.msra.mxu0 0.0
    %178 = vmatprep.subr.mxu0 0.0
    %179 = vmatpush1.msra.mxu0 0.0
    %180 = vmatprep.subr.mxu0 0.0
    %181 = vmatpush1.msra.mxu0 0.0
    %182 = vmatprep.subr.mxu0 0.0
    %183 = vmatpush1.msra.mxu0 0.0
    %184 = vmatprep.subr.mxu0 0.0
    %185 = vmatpush1.msra.mxu0 0.0
    %186 = vmatprep.subr.mxu0 0.0
    %187 = vmatpush1.msra.mxu0 0.0
    %188 = vmatprep.subr.mxu0 0.0
    %189 = vmatpush1.msra.mxu0 0.0
    %190 = vmatprep.subr.mxu0 0.0
    %191 = vmatpush1.msra.mxu0 0.0
    %192 = vmatprep.subr.mxu0 0.0
    %193 = vmatpush1.msra.mxu0 0.0
    %194 = vmatprep.subr.mxu0 0.0
    %195 = vmatpush1.msra.mxu0 0.0
    %196 = vmatprep.subr.mxu0 0.0
    %197 = vmatpush1.msra.mxu0 0.0
    %198 = vmatprep.mubr.f32.mxu0 0.0
    %199 = vmatmul.mubr.f32.gmra.mrb[0].mxu0 %v132
    %v200 = vpop.f32.mrb[0].mxu0
    %v201 = vadd.f32 %v128, %v200
    %v202 = vpop.f32.mrb[0].mxu0
    %203 = vdwg.mxu0
    %v204 = vmax.f32 %v201, 0.0
    %v205 = vmin.f32 %v204, 6.0
    %v206 = vld [vmem:[%s5] sm:$0xff]
    %v207 = vld [vmem:[%s5 + $0x8] sm:$0xff]
    %v208 = vld [vmem:[%s5 + $0x10] sm:$0xff]
    %v209 = vld [vmem:[%s5 + $0x18] sm:$0xff]
    %v210 = vld [vmem:[%s5 + $0x20] sm:$0xff]
    %v211 = vld [vmem:[%s5 + $0x28] sm:$0xff]
    %v212 = vld [vmem:[%s6] sm:$0x1]
    %v214 = vlaneseq
    %v215 = vshrl.u32 %v214, 7
    %v216 = vsub.s32 0, %v215
    %v217 = vrot.slane %v212, %v216
    %vm219 = vcmask 392192
    %v221 = vsel %vm219, %v205, 0
    %223 = vmatprep.subr.mxu0 0.0
    %224 = vmatpush1.msra.mxu0 %v206
    %225 = vmatprep.subr.mxu0 0.0
    %226 = vmatpush1.msra.mxu0 %v207
    %227 = vmatprep.subr.mxu0 0.0
    %228 = vmatpush1.msra.mxu0 %v208
    %229 = vmatprep.subr.mxu0 0.0
    %230 = vmatpush1.msra.mxu0 %v209
    %231 = vmatprep.subr.mxu0 0.0
    %232 = vmatpush1.msra.mxu0 %v210
    %233 = vmatprep.subr.mxu0 0.0
    %234 = vmatpush1.msra.mxu0 %v211
    %235 = vmatprep.subr.mxu0 0.0
    %236 = vmatpush1.msra.mxu0 0.0
    %237 = vmatprep.subr.mxu0 0.0
    %238 = vmatpush1.msra.mxu0 0.0
    %239 = vmatprep.subr.mxu0 0.0
    %240 = vmatpush1.msra.mxu0 0.0
    %241 = vmatprep.subr.mxu0 0.0
    %242 = vmatpush1.msra.mxu0 0.0
    %243 = vmatprep.subr.mxu0 0.0
    %244 = vmatpush1.msra.mxu0 0.0
    %245 = vmatprep.subr.mxu0 0.0
    %246 = vmatpush1.msra.mxu0 0.0
    %247 = vmatprep.subr.mxu0 0.0
    %248 = vmatpush1.msra.mxu0 0.0
    %249 = vmatprep.subr.mxu0 0.0
    %250 = vmatpush1.msra.mxu0 0.0
    %251 = vmatprep.subr.mxu0 0.0
    %252 = vmatpush1.msra.mxu0 0.0
    %253 = vmatprep.subr.mxu0 0.0
    %254 = vmatpush1.msra.mxu0 0.0
    %255 = vmatprep.subr.mxu0 0.0
    %256 = vmatpush1.msra.mxu0 0.0
    %257 = vmatprep.subr.mxu0 0.0
    %258 = vmatpush1.msra.mxu0 0.0
    %259 = vmatprep.subr.mxu0 0.0
    %260 = vmatpush1.msra.mxu0 0.0
    %261 = vmatprep.subr.mxu0 0.0
    %262 = vmatpush1.msra.mxu0 0.0
    %263 = vmatprep.subr.mxu0 0.0
    %264 = vmatpush1.msra.mxu0 0.0
    %265 = vmatprep.subr.mxu0 0.0
    %266 = vmatpush1.msra.mxu0 0.0
    %267 = vmatprep.subr.mxu0 0.0
    %268 = vmatpush1.msra.mxu0 0.0
    %269 = vmatprep.subr.mxu0 0.0
    %270 = vmatpush1.msra.mxu0 0.0
    %271 = vmatprep.subr.mxu0 0.0
    %272 = vmatpush1.msra.mxu0 0.0
    %273 = vmatprep.subr.mxu0 0.0
    %274 = vmatpush1.msra.mxu0 0.0
    %275 = vmatprep.subr.mxu0 0.0
    %276 = vmatpush1.msra.mxu0 0.0
    %277 = vmatprep.subr.mxu0 0.0
    %278 = vmatpush1.msra.mxu0 0.0
    %279 = vmatprep.subr.mxu0 0.0
    %280 = vmatpush1.msra.mxu0 0.0
    %281 = vmatprep.subr.mxu0 0.0
    %282 = vmatpush1.msra.mxu0 0.0
    %283 = vmatprep.subr.mxu0 0.0
    %284 = vmatpush1.msra.mxu0 0.0
    %285 = vmatprep.subr.mxu0 0.0
    %286 = vmatpush1.msra.mxu0 0.0
    %287 = vmatprep.mubr.f32.mxu0 0.0
    %288 = vmatmul.mubr.f32.gmra.mrb[0].mxu0 %v221
    %v289 = vpop.f32.mrb[0].mxu0
    %v290 = vadd.f32 %v217, %v289
    %v291 = vpop.f32.mrb[0].mxu0
    %292 = vdwg.mxu0
    %vm293 = vcmask 130048
    %294 = vst.msk [vmem:[#allocation2] sm:$0xff] %vm293, %v290
    // Predicated region
    $region30: #{tpu_custom_call.1} parent=1 // pred_check
      _
    $region31: #{tpu_custom_call.1} parent=1 // pred_check_branch
      %296 = sbr.rel (0) target = $region33
    $region32: #{tpu_custom_call.1} parent=1 // pred_region
      %s298 = ssub.s32 128, 128
      %299 = vsyncadd [#allocation3], %s298
      %s301 = sshll.u32 [#allocation2], 4
      %s302 = int_to_ptr.vmem [resolvable:$true] %s301
      %304 = dma.vmem_to_hbm [thread:$0]  %s302, 128, %s7, [#allocation3]
    $region33: #{tpu_custom_call.1} parent=1 // pred_fallthru
      _
    // Predicated region
    $region34: #{tpu_custom_call.1} parent=1 // pred_check
      _
    $region35: #{tpu_custom_call.1} parent=1 // pred_check_branch
      %306 = sbr.rel (0) target = $region37
    $region36: #{tpu_custom_call.1} parent=1 // pred_region
      %307 = dma.done [#allocation3], 128
    $region37: #{tpu_custom_call.1} parent=1 // pred_fallthru
      _
    %308 = vsyncpa [#allocation3], 1

</llo_original>
